<compile_context>
chip_gen: v6e
topology: v6e:2x2x1
jax: 0.10.0
libtpu: 0.0.40
codegen_flags: <defaults>
</compile_context>

<pallas_src>
import functools

import numpy as np
import jax
import jax.numpy as jnp
from jax import lax
from jax.experimental import pallas as pl
from jax.experimental.pallas import tpu as pltpu

M_CONST = 1.0
Z = 1
BN_EPS = 1e-5

LANE = 128            # TPU lane width; batch tiles stay multiples of this
TARGET_TILE = 2048    # target batch samples per grid step (review: 2048-4096)


def get_slice_array1(i):
    temp = np.tile(np.arange(i + 1), Z)
    return temp + np.repeat(np.arange(Z), i + 1) * 1


def _choose_tiling(B):
    """Pick (tile, padded_batch, n_tiles).

    Tiles are lane-aligned and sized near TARGET_TILE, and the number of grid
    steps is kept even so v7x's two TensorCores both get work under
    dimension_semantics=("parallel",).  (v5e/v6e are single-TC: no cost.)
    """
    n_tiles = max(2, int(np.ceil(B / TARGET_TILE)))
    n_tiles += n_tiles % 2                       # even grid length for 2-TC v7x
    tile = int(np.ceil(B / (n_tiles * LANE))) * LANE
    return tile, tile * n_tiles, n_tiles


def _net_kernel(x_ref, a1_ref, c1_ref, w2_ref, b2_ref, w3_ref, b3_ref,
                w4_ref, b4_ref, out_ref):
    # Transposed, lane-dense layout: batch lives on the 128-lane axis.
    #   x_ref   : (1, BT) f32
    #   weights : (out_features, in_features); bf16 or f32 (MXU operand dtype)
    #   biases  : (out_features, 1) f32
    #   out_ref : (1, BT) f32  -> full-lane-width unmasked stores.
    x = x_ref[...]                                               # (1, BT)

    # Layer 1 with BatchNorm folded in (in_features == 1 -> VPU broadcast mul).
    h1 = jnp.maximum(a1_ref[...] * x + c1_ref[...], 0.0)        # (32, BT) f32

    w2 = w2_ref[...]
    md = w2.dtype                                                # MXU operand dtype

    # Linear(32, 64) + ReLU  (MXU, f32 accumulate)
    h2 = jnp.dot(w2, h1.astype(md),
                 preferred_element_type=jnp.float32) + b2_ref[...]
    h2 = jnp.maximum(h2, 0.0)                                    # (64, BT) f32

    # Linear(64, 128) + ReLU  (MXU, f32 accumulate)
    h3 = jnp.dot(w3_ref[...], h2.astype(md),
                 preferred_element_type=jnp.float32) + b3_ref[...]
    h3 = jnp.maximum(h3, 0.0)                                    # (128, BT) f32

    # Linear(128, 1) on the MXU (K=128 fills the contraction dim), then tanh.
    pre = jnp.dot(w4_ref[...], h3.astype(md),
                  preferred_element_type=jnp.float32) + b4_ref[...]  # (1, BT)
    out_ref[...] = M_CONST * jnp.tanh(pre)


def net_independent_forward(x, params, mxu_bf16=True):
    """Forward pass of Net_independent. Returns ([array (B, 1+z)], c)."""
    B = x.shape[0]
    sl = np.asarray(get_slice_array1(0))                 # -> [0] for z = 1
    x_col = x[:, sl].astype(jnp.float32)                  # (B, 1)

    # BatchNorm1d training-mode statistics over the FULL (un-tiled) batch,
    # biased variance (PyTorch .train() forward semantics).  Single-pass
    # E[x^2] - mean^2 form; fine here since data is ~standardized (watch
    # cancellation only if |mean| >> std).
    mean = jnp.mean(x_col)
    var = jnp.maximum(jnp.mean(jnp.square(x_col)) - jnp.square(mean), 0.0)

    # Fold BN into layer 1 (exact algebra):
    #   xn = (x - mean)*s + beta,  s = gamma * rsqrt(var + eps)
    #   h1 = relu(w1^T xn + b1)   = relu(a1 * x + c1)
    s = params["bn_gamma"][0] * lax.rsqrt(var + BN_EPS)
    shift = params["bn_beta"][0] - mean * s
    w1t = params["w1"].T                                   # (32, 1)
    a1 = (w1t * s).astype(jnp.float32)                     # (32, 1)
    c1 = (w1t * shift + params["b1"].reshape(32 * Z, 1)).astype(jnp.float32)

    # MXU operand dtype: bf16 on v6e/v7x-friendly path, f32 otherwise.
    mdt = jnp.bfloat16 if mxu_bf16 else jnp.float32
    w2t = params["w2"].T.astype(mdt)                       # (64, 32)
    b2c = params["b2"].reshape(64 * Z, 1).astype(jnp.float32)
    w3t = params["w3"].T.astype(mdt)                       # (128, 64)
    b3c = params["b3"].reshape(128 * Z, 1).astype(jnp.float32)
    w4t = params["w4"].T.astype(mdt)                       # (1, 128)
    b4c = params["b4"].reshape(1, 1).astype(jnp.float32)

    # Lane-dense layout: batch on the lane axis, padded to an even tile grid.
    tile, bp, n_tiles = _choose_tiling(B)
    x_t = jnp.pad(x_col.reshape(1, B), ((0, 0), (0, bp - B)))   # (1, Bp)

    const = lambda i: (0, 0)                  # weights/biases stay resident
    grid = (n_tiles,)

    delta_t = pl.pallas_call(
        _net_kernel,
        out_shape=jax.ShapeDtypeStruct((1, bp), jnp.float32),
        grid_spec=pltpu.PrefetchScalarGridSpec(
            num_scalar_prefetch=0,
            grid=grid,
            in_specs=[
                pl.BlockSpec((1, tile), lambda i: (0, i)),       # x_t
                pl.BlockSpec((32 * Z, 1 * Z), const),            # a1 (BN-folded w1)
                pl.BlockSpec((32 * Z, 1), const),                # c1 (BN-folded b1)
                pl.BlockSpec((64 * Z, 32 * Z), const),           # w2^T
                pl.BlockSpec((64 * Z, 1), const),                # b2
                pl.BlockSpec((128 * Z, 64 * Z), const),          # w3^T
                pl.BlockSpec((128 * Z, 1), const),               # b3
                pl.BlockSpec((1 * Z, 128 * Z), const),           # w4^T
                pl.BlockSpec((1, 1), const),                     # b4
            ],
            out_specs=pl.BlockSpec((1, tile), lambda i: (0, i)),
        ),
        compiler_params=pltpu.CompilerParams(
            dimension_semantics=("parallel",),        # shards over v7x's 2 TCs
            vmem_limit_bytes=32 * 1024 * 1024,        # matches v7x scoped default
        ),
    )(x_t, a1, c1, w2t, b2c, w3t, b3c, w4t, b4c)

    delta = delta_t[0, :B].reshape(B, 1)                             # (B, 1)

    # Constant first column (delta0_s[0] * ones) + concat in plain JAX.
    d0_col = jnp.full((B, 1), params["delta0_s"][0], jnp.float32)
    out = jnp.concatenate([d0_col, delta], axis=1)                   # (B, 2)
    return [out], params["c"]
    # TODO(synk): BatchNorm1d running_mean/running_var buffer updates are not
    # tracked (pure forward comparison, matching the reference usage).


def _reference_forward(x, params, mxu_bf16=False):
    """Pure-JAX reference replicating the PyTorch forward (training-mode BN).

    With mxu_bf16=True the matmul operands get the same bf16 casts the kernel
    applies (f32 accumulation), giving a numerics-matched reference.
    """
    sl = np.asarray(get_slice_array1(0))
    xc = x[:, sl].astype(jnp.float32)
    mean = jnp.mean(xc)
    var = jnp.mean((xc - mean) ** 2)
    xn = (xc - mean) / jnp.sqrt(var + BN_EPS) * params["bn_gamma"] + params["bn_beta"]
    md = jnp.bfloat16 if mxu_bf16 else jnp.float32
    h1 = jax.nn.relu(xn @ params["w1"] + params["b1"])
    h2 = jax.nn.relu(jnp.dot(h1.astype(md), params["w2"].astype(md),
                             preferred_element_type=jnp.float32) + params["b2"])
    h3 = jax.nn.relu(jnp.dot(h2.astype(md), params["w3"].astype(md),
                             preferred_element_type=jnp.float32) + params["b3"])
    pre = jnp.dot(h3.astype(md), params["w4"].astype(md),
                  preferred_element_type=jnp.float32) + params["b4"]
    delta = M_CONST * jnp.tanh(pre)
    d0 = jnp.full((x.shape[0], 1), params["delta0_s"][0], jnp.float32)
    return jnp.concatenate([d0, delta], axis=1)


def init_params(key):
    """Deterministic parameter init (PyTorch-default-style uniform bounds)."""
    def linear(key, fan_in, fan_out):
        k1, k2 = jax.random.split(key)
        bound = 1.0 / np.sqrt(fan_in)
        w = jax.random.uniform(k1, (fan_in, fan_out), jnp.float32, -bound, bound)
        b = jax.random.uniform(k2, (fan_out,), jnp.float32, -bound, bound)
        return w, b

    k1, k2, k3, k4 = jax.random.split(key, 4)
    w1, b1 = linear(k1, 1 * Z, 32 * Z)
    w2, b2 = linear(k2, 32 * Z, 64 * Z)
    w3, b3 = linear(k3, 64 * Z, 128 * Z)
    w4, b4 = linear(k4, 128 * Z, Z)

    return {
        "bn_gamma": jnp.ones((Z,), jnp.float32),     # BatchNorm1d weight init
        "bn_beta": jnp.zeros((Z,), jnp.float32),     # BatchNorm1d bias init
        "w1": w1, "b1": b1,
        "w2": w2, "b2": b2,
        "w3": w3, "b3": b3,
        "w4": w4, "b4": b4,
        "delta0_s": jnp.zeros((Z,), jnp.float32),    # nn.Parameter([0]*z)
        "c": jnp.zeros((1,), jnp.float32),           # nn.Parameter([0])
    }


if __name__ == "__main__":
    key = jax.random.PRNGKey(0)
    pkey, xkey = jax.random.split(key)

    params = init_params(pkey)

    B = 1000                                  # not a tile multiple -> tests padding
    x = jax.random.normal(xkey, (B, Z), jnp.float32)

    # Whole forward is jitted so the slice/pad/stats/concat fuse around the
    # pallas_call (review item: trim wrapper-side HBM passes / dispatches).
    fwd_bf16 = jax.jit(functools.partial(net_independent_forward, mxu_bf16=True))
    fwd_f32 = jax.jit(functools.partial(net_independent_forward, mxu_bf16=False))

    # Primary (bf16 MXU operands, f32 accumulate) path.
    delta_list, c = fwd_bf16(x, params)
    out_bf16 = jax.block_until_ready(delta_list[0])
    jax.block_until_ready(c)

    assert out_bf16.shape == (B, 1 + Z)
    assert bool(jnp.all(jnp.isfinite(out_bf16)))

    ref_bf16 = _reference_forward(x, params, mxu_bf16=True)
    np.testing.assert_allclose(np.asarray(out_bf16), np.asarray(ref_bf16),
                               rtol=5e-3, atol=1e-3)

    # Full-f32 MXU path: exact check against the PyTorch-faithful reference.
    delta_list_f32, _ = fwd_f32(x, params)
    out_f32 = jax.block_until_ready(delta_list_f32[0])
    ref_f32 = _reference_forward(x, params, mxu_bf16=False)
    np.testing.assert_allclose(np.asarray(out_f32), np.asarray(ref_f32),
                               rtol=2e-4, atol=2e-5)

    print("KERNEL_OK")
</pallas_src>

<mosaic_0001>
module attributes {stable_mosaic.version = 11 : i64} {
  func.func @_net_kernel(%arg0: i32, %arg1: memref<1x512xf32, #tpu.memory_space<vmem>>, %arg2: memref<32x1xf32, #tpu.memory_space<vmem>>, %arg3: memref<32x1xf32, #tpu.memory_space<vmem>>, %arg4: memref<64x32xbf16, #tpu.memory_space<vmem>>, %arg5: memref<64x1xf32, #tpu.memory_space<vmem>>, %arg6: memref<128x64xbf16, #tpu.memory_space<vmem>>, %arg7: memref<128x1xf32, #tpu.memory_space<vmem>>, %arg8: memref<1x128xbf16, #tpu.memory_space<vmem>>, %arg9: memref<1x1xf32, #tpu.memory_space<vmem>>, %arg10: memref<1x512xf32, #tpu.memory_space<vmem>>) attributes {dimension_semantics = [#tpu.dimension_semantics<parallel>], iteration_bounds = array<i64: 2>, scalar_prefetch = 0 : i64, scratch_operands = 0 : i64, tpu.core_type = #tpu.core_type<tc>, window_params = [{transform_indices = @transform_0, window_bounds = array<i64: 1, 512>}, {pipeline_mode = #tpu.pipeline_mode<synchronous>, transform_indices = @transform_1, window_bounds = array<i64: 32, 1>}, {pipeline_mode = #tpu.pipeline_mode<synchronous>, transform_indices = @transform_2, window_bounds = array<i64: 32, 1>}, {pipeline_mode = #tpu.pipeline_mode<synchronous>, transform_indices = @transform_3, window_bounds = array<i64: 64, 32>}, {pipeline_mode = #tpu.pipeline_mode<synchronous>, transform_indices = @transform_4, window_bounds = array<i64: 64, 1>}, {pipeline_mode = #tpu.pipeline_mode<synchronous>, transform_indices = @transform_5, window_bounds = array<i64: 128, 64>}, {pipeline_mode = #tpu.pipeline_mode<synchronous>, transform_indices = @transform_6, window_bounds = array<i64: 128, 1>}, {pipeline_mode = #tpu.pipeline_mode<synchronous>, transform_indices = @transform_7, window_bounds = array<i64: 1, 128>}, {pipeline_mode = #tpu.pipeline_mode<synchronous>, transform_indices = @transform_8, window_bounds = array<i64: 1, 1>}, {transform_indices = @transform_9, window_bounds = array<i64: 1, 512>}]} {
    %c0 = arith.constant 0 : index
    %c0_0 = arith.constant 0 : index
    %0 = vector.load %arg1[%c0, %c0_0] : memref<1x512xf32, #tpu.memory_space<vmem>>, vector<1x512xf32>
    %c0_1 = arith.constant 0 : index
    %c0_2 = arith.constant 0 : index
    %1 = vector.load %arg2[%c0_1, %c0_2] : memref<32x1xf32, #tpu.memory_space<vmem>>, vector<32x1xf32>
    %2 = vector.broadcast %1 : vector<32x1xf32> to vector<32x512xf32>
    %3 = vector.broadcast %0 : vector<1x512xf32> to vector<32x512xf32>
    %4 = arith.mulf %2, %3 : vector<32x512xf32>
    %c0_3 = arith.constant 0 : index
    %c0_4 = arith.constant 0 : index
    %5 = vector.load %arg3[%c0_3, %c0_4] : memref<32x1xf32, #tpu.memory_space<vmem>>, vector<32x1xf32>
    %6 = vector.broadcast %5 : vector<32x1xf32> to vector<32x512xf32>
    %7 = arith.addf %4, %6 : vector<32x512xf32>
    %cst = arith.constant 0.000000e+00 : f32
    %8 = vector.broadcast %cst : f32 to vector<32x512xf32>
    %9 = arith.maximumf %7, %8 : vector<32x512xf32>
    %c0_5 = arith.constant 0 : index
    %c0_6 = arith.constant 0 : index
    %10 = vector.load %arg4[%c0_5, %c0_6] : memref<64x32xbf16, #tpu.memory_space<vmem>>, vector<64x32xbf16>
    %11 = arith.truncf %9 : vector<32x512xf32> to vector<32x512xbf16>
    %cst_7 = arith.constant dense<0.000000e+00> : vector<64x512xf32>
    %12 = tpu.matmul %10, %11, %cst_7 {dimension_numbers = #tpu.dot_dimension_numbers<[1], [0], [0], [1], [0, 0, 1, 1], [], []>} : vector<64x32xbf16>, vector<32x512xbf16>, vector<64x512xf32> -> vector<64x512xf32>
    %c0_8 = arith.constant 0 : index
    %c0_9 = arith.constant 0 : index
    %13 = vector.load %arg5[%c0_8, %c0_9] : memref<64x1xf32, #tpu.memory_space<vmem>>, vector<64x1xf32>
    %14 = vector.broadcast %13 : vector<64x1xf32> to vector<64x512xf32>
    %15 = arith.addf %12, %14 : vector<64x512xf32>
    %cst_10 = arith.constant 0.000000e+00 : f32
    %16 = vector.broadcast %cst_10 : f32 to vector<64x512xf32>
    %17 = arith.maximumf %15, %16 : vector<64x512xf32>
    %c0_11 = arith.constant 0 : index
    %c0_12 = arith.constant 0 : index
    %18 = vector.load %arg6[%c0_11, %c0_12] : memref<128x64xbf16, #tpu.memory_space<vmem>>, vector<128x64xbf16>
    %19 = arith.truncf %17 : vector<64x512xf32> to vector<64x512xbf16>
    %cst_13 = arith.constant dense<0.000000e+00> : vector<128x512xf32>
    %20 = tpu.matmul %18, %19, %cst_13 {dimension_numbers = #tpu.dot_dimension_numbers<[1], [0], [0], [1], [0, 0, 1, 1], [], []>} : vector<128x64xbf16>, vector<64x512xbf16>, vector<128x512xf32> -> vector<128x512xf32>
    %c0_14 = arith.constant 0 : index
    %c0_15 = arith.constant 0 : index
    %21 = vector.load %arg7[%c0_14, %c0_15] : memref<128x1xf32, #tpu.memory_space<vmem>>, vector<128x1xf32>
    %22 = vector.broadcast %21 : vector<128x1xf32> to vector<128x512xf32>
    %23 = arith.addf %20, %22 : vector<128x512xf32>
    %cst_16 = arith.constant 0.000000e+00 : f32
    %24 = vector.broadcast %cst_16 : f32 to vector<128x512xf32>
    %25 = arith.maximumf %23, %24 : vector<128x512xf32>
    %c0_17 = arith.constant 0 : index
    %c0_18 = arith.constant 0 : index
    %26 = vector.load %arg8[%c0_17, %c0_18] : memref<1x128xbf16, #tpu.memory_space<vmem>>, vector<1x128xbf16>
    %27 = arith.truncf %25 : vector<128x512xf32> to vector<128x512xbf16>
    %cst_19 = arith.constant dense<0.000000e+00> : vector<1x512xf32>
    %28 = tpu.matmul %26, %27, %cst_19 {dimension_numbers = #tpu.dot_dimension_numbers<[1], [0], [0], [1], [0, 0, 1, 1], [], []>} : vector<1x128xbf16>, vector<128x512xbf16>, vector<1x512xf32> -> vector<1x512xf32>
    %c0_20 = arith.constant 0 : index
    %c0_21 = arith.constant 0 : index
    %29 = vector.load %arg9[%c0_20, %c0_21] : memref<1x1xf32, #tpu.memory_space<vmem>>, vector<1x1xf32>
    %30 = vector.broadcast %29 : vector<1x1xf32> to vector<1x512xf32>
    %31 = arith.addf %28, %30 : vector<1x512xf32>
    %32 = math.tanh %31 : vector<1x512xf32>
    %cst_22 = arith.constant 1.000000e+00 : f32
    %33 = vector.broadcast %cst_22 : f32 to vector<1x512xf32>
    %34 = arith.mulf %33, %32 : vector<1x512xf32>
    %c0_23 = arith.constant 0 : index
    %c0_24 = arith.constant 0 : index
    %35 = vector.load %arg10[%c0_23, %c0_24] : memref<1x512xf32, #tpu.memory_space<vmem>>, vector<1x512xf32>
    tpu.vector_store %arg10[%c0_23, %c0_24], %34 {strides = array<i32>} : memref<1x512xf32, #tpu.memory_space<vmem>>, vector<1x512xf32>,
    return
  }
  func.func @transform_0(%arg0: i32) -> (i32, i32) {
    %c0_i32 = arith.constant 0 : i32
    %c0_i32_0 = arith.constant 0 : i32
    return %c0_i32, %arg0 : i32, i32
  }
  func.func @transform_1(%arg0: i32) -> (i32, i32) {
    %c0_i32 = arith.constant 0 : i32
    %c0_i32_0 = arith.constant 0 : i32
    %c0_i32_1 = arith.constant 0 : i32
    return %c0_i32, %c0_i32_0 : i32, i32
  }
  func.func @transform_2(%arg0: i32) -> (i32, i32) {
    %c0_i32 = arith.constant 0 : i32
    %c0_i32_0 = arith.constant 0 : i32
    %c0_i32_1 = arith.constant 0 : i32
    return %c0_i32, %c0_i32_0 : i32, i32
  }
  func.func @transform_3(%arg0: i32) -> (i32, i32) {
    %c0_i32 = arith.constant 0 : i32
    %c0_i32_0 = arith.constant 0 : i32
    %c0_i32_1 = arith.constant 0 : i32
    return %c0_i32, %c0_i32_0 : i32, i32
  }
  func.func @transform_4(%arg0: i32) -> (i32, i32) {
    %c0_i32 = arith.constant 0 : i32
    %c0_i32_0 = arith.constant 0 : i32
    %c0_i32_1 = arith.constant 0 : i32
    return %c0_i32, %c0_i32_0 : i32, i32
  }
  func.func @transform_5(%arg0: i32) -> (i32, i32) {
    %c0_i32 = arith.constant 0 : i32
    %c0_i32_0 = arith.constant 0 : i32
    %c0_i32_1 = arith.constant 0 : i32
    return %c0_i32, %c0_i32_0 : i32, i32
  }
  func.func @transform_6(%arg0: i32) -> (i32, i32) {
    %c0_i32 = arith.constant 0 : i32
    %c0_i32_0 = arith.constant 0 : i32
    %c0_i32_1 = arith.constant 0 : i32
    return %c0_i32, %c0_i32_0 : i32, i32
  }
  func.func @transform_7(%arg0: i32) -> (i32, i32) {
    %c0_i32 = arith.constant 0 : i32
    %c0_i32_0 = arith.constant 0 : i32
    %c0_i32_1 = arith.constant 0 : i32
    return %c0_i32, %c0_i32_0 : i32, i32
  }
  func.func @transform_8(%arg0: i32) -> (i32, i32) {
    %c0_i32 = arith.constant 0 : i32
    %c0_i32_0 = arith.constant 0 : i32
    %c0_i32_1 = arith.constant 0 : i32
    return %c0_i32, %c0_i32_0 : i32, i32
  }
  func.func @transform_9(%arg0: i32) -> (i32, i32) {
    %c0_i32 = arith.constant 0 : i32
    %c0_i32_0 = arith.constant 0 : i32
    return %c0_i32, %arg0 : i32, i32
  }
}

</mosaic_0001>

<llo_original>
// kernel: net_independent_forward.1
$region0: #{net_independent_forward.1}
  #allocation0 [shape = 'u32[]', space=smem, size = 0x4, offset = 0x4, fixed_abs, tag = 'smem constant byte address 0x4 - core index']
  #allocation1 [shape = 'u32[144,128]{1,0:T(1,128)}', space=vmem, size = 0x12000, scoped, tag = 'internal scratch']
  #allocation2 [shape = 'f32[1,1]{1,0:T(1,128)S(1)}', space=vmem, size = 0x200, scoped, tag = 'scoped memory for net_independent_forward.1']
  %s0 = inlined_call_operand.vmem [shape: f32[1,1024], index: 0, kind: input, shape index: {}]
  %s1 = inlined_call_operand.vmem [shape: f32[32,1], index: 1, kind: input, shape index: {}]
  %s2 = inlined_call_operand.vmem [shape: f32[32,1], index: 2, kind: input, shape index: {}]
  %s3 = inlined_call_operand.vmem [shape: bf16[64,32], index: 3, kind: input, shape index: {}]
  %s4 = inlined_call_operand.vmem [shape: f32[64,1], index: 4, kind: input, shape index: {}]
  %s5 = inlined_call_operand.vmem [shape: bf16[128,64], index: 5, kind: input, shape index: {}]
  %s6 = inlined_call_operand.vmem [shape: f32[128,1], index: 6, kind: input, shape index: {}]
  %s7 = inlined_call_operand.vmem [shape: bf16[1,128], index: 7, kind: input, shape index: {}]
  %s8 = inlined_call_operand.<no memory space> [shape: f32[1,1], index: 8, kind: input, shape index: {}]
  %s9 = inlined_call_operand.vmem [shape: f32[1,1024], index: 9, kind: output, shape index: {}]
  %s10 = sld [smem:[#allocation0]]
  $region69: #{net_independent_forward.1} parent=0
    _
  %s12 = ssub.s32 1, %s10
  %s13 = scalar_select 0, %s12, %s10
  %v14 = vstv %s8
  %15 = vst [vmem:[#allocation2] sm:$0x1] %v14
  loop: start=0, step=1, limit=4
  $region2: #{net_independent_forward.1} parent=0 // loop_pre_header
    _
  $region3: #{net_independent_forward.1} parent=0 // loop_header
    %s17 = sphi 0, %s21
    %p18 = scmp.ge.s32.totalorder %s17, 4
    %s27 = sphi 0, %s29
    %s30 = sphi 0, %s27
    %s31 = sphi 0, %s30
    %s47 = sphi 0, %s31
    %s51 = sphi 0, %s51
    %s53 = sphi 0, %s51
    %s54 = sphi 0, %s53
    %s68 = sphi 0, %s54
    %s72 = sphi 0, %s72
    %s74 = sphi 0, %s72
    %s75 = sphi 0, %s74
    %s89 = sphi 0, %s75
    %s93 = sphi 0, %s93
    %s95 = sphi 0, %s93
    %s96 = sphi 0, %s95
    %s110 = sphi 0, %s96
    %s114 = sphi 0, %s114
    %s116 = sphi 0, %s114
    %s117 = sphi 0, %s116
    %s131 = sphi 0, %s117
    %s135 = sphi 0, %s135
    %s137 = sphi 0, %s135
    %s138 = sphi 0, %s137
    %s152 = sphi 0, %s138
    %s156 = sphi 0, %s156
    %s158 = sphi 0, %s156
    %s159 = sphi 0, %s158
    %s173 = sphi 0, %s159
    %s177 = sphi 0, %s177
    %s179 = sphi 0, %s177
    %s180 = sphi 0, %s179
    %s194 = sphi 0, %s180
    %s198 = sphi 0, %s198
    %s200 = sphi 0, %s198
    %s201 = sphi 0, %s200
    %s215 = sphi 0, %s201
    %s221 = sphi 0, %s223
    %s224 = sphi 0, %s221
    %s225 = sphi 0, %s224
    %s241 = sphi 0, %s225
  $region4: #{net_independent_forward.1} parent=0 // loop_header_branch
    %20 = sbr.rel (%p18) target = $region8
  $region5: #{net_independent_forward.1} parent=0 // loop_body
    %s22 = ssub.s32 %s17, 1
    %s23 = ssub.s32 %s17, 2
    %s24 = sadd.s32 %s17, 1
    %s25 = ssub.s32 %s17, %s24
    %p26 = scmp.eq.s32.totalorder %s25, 0
    %s28 = sadd.s32 %s27, 1
    %s29 = scalar_select %p26, %s27, %s28
    %p32 = pneg %p26
    %p33 = scmp.eq.s32.totalorder %s17, 1
    %p34 = por %p32, %p33
    %p35 = scmp.ne.s32.totalorder %s27, %s30
    %p36 = scmp.eq.s32.totalorder %s17, 0
    %p37 = por %p35, %p36
    %p38 = scmp.ne.s32.totalorder %s27, %s30
    %p39 = scmp.eq.s32.totalorder %s22, 1
    %p40 = por %p38, %p39
    %p41 = scmp.ne.s32.totalorder %s30, %s31
    %p42 = scmp.eq.s32.totalorder %s22, 0
    %p43 = por %p41, %p42
    %p44 = scmp.ne.s32.totalorder %s30, %s31
    %p45 = scmp.eq.s32.totalorder %s23, 1
    %p46 = por %p44, %p45
    %p48 = scmp.ne.s32.totalorder %s31, %s47
    %p49 = scmp.eq.s32.totalorder %s23, 0
    %p50 = por %p48, %p49
    %s52 = sadd.s32 %s51, 1
    %p55 = scmp.eq.s32.totalorder %s17, 1
    %p56 = scmp.ne.s32.totalorder %s51, %s53
    %p57 = scmp.eq.s32.totalorder %s17, 0
    %p58 = por %p56, %p57
    %p59 = scmp.ne.s32.totalorder %s51, %s53
    %p60 = scmp.eq.s32.totalorder %s22, 1
    %p61 = por %p59, %p60
    %p62 = scmp.ne.s32.totalorder %s53, %s54
    %p63 = scmp.eq.s32.totalorder %s22, 0
    %p64 = por %p62, %p63
    %p65 = scmp.ne.s32.totalorder %s53, %s54
    %p66 = scmp.eq.s32.totalorder %s23, 1
    %p67 = por %p65, %p66
    %p69 = scmp.ne.s32.totalorder %s54, %s68
    %p70 = scmp.eq.s32.totalorder %s23, 0
    %p71 = por %p69, %p70
    %s73 = sadd.s32 %s72, 1
    %p76 = scmp.eq.s32.totalorder %s17, 1
    %p77 = scmp.ne.s32.totalorder %s72, %s74
    %p78 = scmp.eq.s32.totalorder %s17, 0
    %p79 = por %p77, %p78
    %p80 = scmp.ne.s32.totalorder %s72, %s74
    %p81 = scmp.eq.s32.totalorder %s22, 1
    %p82 = por %p80, %p81
    %p83 = scmp.ne.s32.totalorder %s74, %s75
    %p84 = scmp.eq.s32.totalorder %s22, 0
    %p85 = por %p83, %p84
    %p86 = scmp.ne.s32.totalorder %s74, %s75
    %p87 = scmp.eq.s32.totalorder %s23, 1
    %p88 = por %p86, %p87
    %p90 = scmp.ne.s32.totalorder %s75, %s89
    %p91 = scmp.eq.s32.totalorder %s23, 0
    %p92 = por %p90, %p91
    %s94 = sadd.s32 %s93, 1
    %p97 = scmp.eq.s32.totalorder %s17, 1
    %p98 = scmp.ne.s32.totalorder %s93, %s95
    %p99 = scmp.eq.s32.totalorder %s17, 0
    %p100 = por %p98, %p99
    %p101 = scmp.ne.s32.totalorder %s93, %s95
    %p102 = scmp.eq.s32.totalorder %s22, 1
    %p103 = por %p101, %p102
    %p104 = scmp.ne.s32.totalorder %s95, %s96
    %p105 = scmp.eq.s32.totalorder %s22, 0
    %p106 = por %p104, %p105
    %p107 = scmp.ne.s32.totalorder %s95, %s96
    %p108 = scmp.eq.s32.totalorder %s23, 1
    %p109 = por %p107, %p108
    %p111 = scmp.ne.s32.totalorder %s96, %s110
    %p112 = scmp.eq.s32.totalorder %s23, 0
    %p113 = por %p111, %p112
    %s115 = sadd.s32 %s114, 1
    %p118 = scmp.eq.s32.totalorder %s17, 1
    %p119 = scmp.ne.s32.totalorder %s114, %s116
    %p120 = scmp.eq.s32.totalorder %s17, 0
    %p121 = por %p119, %p120
    %p122 = scmp.ne.s32.totalorder %s114, %s116
    %p123 = scmp.eq.s32.totalorder %s22, 1
    %p124 = por %p122, %p123
    %p125 = scmp.ne.s32.totalorder %s116, %s117
    %p126 = scmp.eq.s32.totalorder %s22, 0
    %p127 = por %p125, %p126
    %p128 = scmp.ne.s32.totalorder %s116, %s117
    %p129 = scmp.eq.s32.totalorder %s23, 1
    %p130 = por %p128, %p129
    %p132 = scmp.ne.s32.totalorder %s117, %s131
    %p133 = scmp.eq.s32.totalorder %s23, 0
    %p134 = por %p132, %p133
    %s136 = sadd.s32 %s135, 1
    %p139 = scmp.eq.s32.totalorder %s17, 1
    %p140 = scmp.ne.s32.totalorder %s135, %s137
    %p141 = scmp.eq.s32.totalorder %s17, 0
    %p142 = por %p140, %p141
    %p143 = scmp.ne.s32.totalorder %s135, %s137
    %p144 = scmp.eq.s32.totalorder %s22, 1
    %p145 = por %p143, %p144
    %p146 = scmp.ne.s32.totalorder %s137, %s138
    %p147 = scmp.eq.s32.totalorder %s22, 0
    %p148 = por %p146, %p147
    %p149 = scmp.ne.s32.totalorder %s137, %s138
    %p150 = scmp.eq.s32.totalorder %s23, 1
    %p151 = por %p149, %p150
    %p153 = scmp.ne.s32.totalorder %s138, %s152
    %p154 = scmp.eq.s32.totalorder %s23, 0
    %p155 = por %p153, %p154
    %s157 = sadd.s32 %s156, 1
    %p160 = scmp.eq.s32.totalorder %s17, 1
    %p161 = scmp.ne.s32.totalorder %s156, %s158
    %p162 = scmp.eq.s32.totalorder %s17, 0
    %p163 = por %p161, %p162
    %p164 = scmp.ne.s32.totalorder %s156, %s158
    %p165 = scmp.eq.s32.totalorder %s22, 1
    %p166 = por %p164, %p165
    %p167 = scmp.ne.s32.totalorder %s158, %s159
    %p168 = scmp.eq.s32.totalorder %s22, 0
    %p169 = por %p167, %p168
    %p170 = scmp.ne.s32.totalorder %s158, %s159
    %p171 = scmp.eq.s32.totalorder %s23, 1
    %p172 = por %p170, %p171
    %p174 = scmp.ne.s32.totalorder %s159, %s173
    %p175 = scmp.eq.s32.totalorder %s23, 0
    %p176 = por %p174, %p175
    %s178 = sadd.s32 %s177, 1
    %p181 = scmp.eq.s32.totalorder %s17, 1
    %p182 = scmp.ne.s32.totalorder %s177, %s179
    %p183 = scmp.eq.s32.totalorder %s17, 0
    %p184 = por %p182, %p183
    %p185 = scmp.ne.s32.totalorder %s177, %s179
    %p186 = scmp.eq.s32.totalorder %s22, 1
    %p187 = por %p185, %p186
    %p188 = scmp.ne.s32.totalorder %s179, %s180
    %p189 = scmp.eq.s32.totalorder %s22, 0
    %p190 = por %p188, %p189
    %p191 = scmp.ne.s32.totalorder %s179, %s180
    %p192 = scmp.eq.s32.totalorder %s23, 1
    %p193 = por %p191, %p192
    %p195 = scmp.ne.s32.totalorder %s180, %s194
    %p196 = scmp.eq.s32.totalorder %s23, 0
    %p197 = por %p195, %p196
    %s199 = sadd.s32 %s198, 1
    %p202 = scmp.eq.s32.totalorder %s17, 1
    %p203 = scmp.ne.s32.totalorder %s198, %s200
    %p204 = scmp.eq.s32.totalorder %s17, 0
    %p205 = por %p203, %p204
    %p206 = scmp.ne.s32.totalorder %s198, %s200
    %p207 = scmp.eq.s32.totalorder %s22, 1
    %p208 = por %p206, %p207
    %p209 = scmp.ne.s32.totalorder %s200, %s201
    %p210 = scmp.eq.s32.totalorder %s22, 0
    %p211 = por %p209, %p210
    %p212 = scmp.ne.s32.totalorder %s200, %s201
    %p213 = scmp.eq.s32.totalorder %s23, 1
    %p214 = por %p212, %p213
    %p216 = scmp.ne.s32.totalorder %s201, %s215
    %p217 = scmp.eq.s32.totalorder %s23, 0
    %p218 = por %p216, %p217
    %s219 = ssub.s32 %s17, %s24
    %p220 = scmp.eq.s32.totalorder %s219, 0
    %s222 = sadd.s32 %s221, 1
    %s223 = scalar_select %p220, %s221, %s222
    %p226 = pneg %p220
    %p227 = scmp.eq.s32.totalorder %s17, 1
    %p228 = por %p226, %p227
    %p229 = scmp.ne.s32.totalorder %s221, %s224
    %p230 = scmp.eq.s32.totalorder %s17, 0
    %p231 = por %p229, %p230
    %p232 = scmp.ne.s32.totalorder %s221, %s224
    %p233 = scmp.eq.s32.totalorder %s22, 1
    %p234 = por %p232, %p233
    %p235 = scmp.ne.s32.totalorder %s224, %s225
    %p236 = scmp.eq.s32.totalorder %s22, 0
    %p237 = por %p235, %p236
    %p238 = scmp.ne.s32.totalorder %s224, %s225
    %p239 = scmp.eq.s32.totalorder %s23, 1
    %p240 = por %p238, %p239
    %p242 = scmp.ne.s32.totalorder %s225, %s241
    %p243 = scmp.eq.s32.totalorder %s23, 0
    %p244 = por %p242, %p243
    %p245 = scmp.le.s32.totalorder 1, %s17
    %p246 = scmp.lt.s32.totalorder %s17, 3
    %p247 = pnand %p245, %p246
    %p248 = pneg %p247
    // Predicated region
    $region9: #{net_independent_forward.1} parent=5 // pred_check
      _
    $region10: #{net_independent_forward.1} parent=5 // pred_check_branch
      %250 = sbr.rel (%p247) target = $region12
    $region11: #{net_independent_forward.1} parent=5 // pred_region
      %s251 = ssub.s32 %s17, 1
      // Predicated region
      $region13: #{net_independent_forward.1} parent=11 // pred_check
        %p252 = pneg %p64
      $region14: #{net_independent_forward.1} parent=11 // pred_check_branch
        %254 = sbr.rel (%p252) target = $region16
      $region15: #{net_independent_forward.1} parent=11 // pred_region
        _
      $region16: #{net_independent_forward.1} parent=11 // pred_fallthru
        _
      // Predicated region
      $region17: #{net_independent_forward.1} parent=11 // pred_check
        %p255 = pneg %p85
      $region18: #{net_independent_forward.1} parent=11 // pred_check_branch
        %257 = sbr.rel (%p255) target = $region20
      $region19: #{net_independent_forward.1} parent=11 // pred_region
        _
      $region20: #{net_independent_forward.1} parent=11 // pred_fallthru
        _
      // Predicated region
      $region21: #{net_independent_forward.1} parent=11 // pred_check
        %p258 = pneg %p106
      $region22: #{net_independent_forward.1} parent=11 // pred_check_branch
        %260 = sbr.rel (%p258) target = $region24
      $region23: #{net_independent_forward.1} parent=11 // pred_region
        _
      $region24: #{net_independent_forward.1} parent=11 // pred_fallthru
        _
      // Predicated region
      $region25: #{net_independent_forward.1} parent=11 // pred_check
        %p261 = pneg %p127
      $region26: #{net_independent_forward.1} parent=11 // pred_check_branch
        %263 = sbr.rel (%p261) target = $region28
      $region27: #{net_independent_forward.1} parent=11 // pred_region
        _
      $region28: #{net_independent_forward.1} parent=11 // pred_fallthru
        _
      // Predicated region
      $region29: #{net_independent_forward.1} parent=11 // pred_check
        %p264 = pneg %p148
      $region30: #{net_independent_forward.1} parent=11 // pred_check_branch
        %266 = sbr.rel (%p264) target = $region32
      $region31: #{net_independent_forward.1} parent=11 // pred_region
        _
      $region32: #{net_independent_forward.1} parent=11 // pred_fallthru
        _
      // Predicated region
      $region33: #{net_independent_forward.1} parent=11 // pred_check
        %p267 = pneg %p169
      $region34: #{net_independent_forward.1} parent=11 // pred_check_branch
        %269 = sbr.rel (%p267) target = $region36
      $region35: #{net_independent_forward.1} parent=11 // pred_region
        _
      $region36: #{net_independent_forward.1} parent=11 // pred_fallthru
        _
      // Predicated region
      $region37: #{net_independent_forward.1} parent=11 // pred_check
        %p270 = pneg %p190
      $region38: #{net_independent_forward.1} parent=11 // pred_check_branch
        %272 = sbr.rel (%p270) target = $region40
      $region39: #{net_independent_forward.1} parent=11 // pred_region
        _
      $region40: #{net_independent_forward.1} parent=11 // pred_fallthru
        _
      // Predicated region
      $region41: #{net_independent_forward.1} parent=11 // pred_check
        %p273 = pneg %p211
      $region42: #{net_independent_forward.1} parent=11 // pred_check_branch
        %275 = sbr.rel (%p273) target = $region44
      $region43: #{net_independent_forward.1} parent=11 // pred_region
        _
      $region44: #{net_independent_forward.1} parent=11 // pred_fallthru
        _
    $region12: #{net_independent_forward.1} parent=5 // pred_fallthru
      _
    %p276 = scmp.lt.s32.totalorder %s17, 2
    // Predicated region
    $region45: #{net_independent_forward.1} parent=5 // pred_check
      %p277 = pneg %p276
    $region46: #{net_independent_forward.1} parent=5 // pred_check_branch
      %279 = sbr.rel (%p277) target = $region48
    $region47: #{net_independent_forward.1} parent=5 // pred_region
      // Predicated region
      $region49: #{net_independent_forward.1} parent=47 // pred_check
        %p280 = pneg %p37
      $region50: #{net_independent_forward.1} parent=47 // pred_check_branch
        %282 = sbr.rel (%p280) target = $region52
      $region51: #{net_independent_forward.1} parent=47 // pred_region
        %s283 = smul.u32 4, %s17
        %p284 = scmp.lt.s32.totalorder %s283, 7
        %s285 = scalar_select %p284, %s283, 7
        %s286 = scalar_lea.vmem %s0, %s285
        %s287 = smul.u32 4, %s17
      $region52: #{net_independent_forward.1} parent=47 // pred_fallthru
        _
    $region48: #{net_independent_forward.1} parent=5 // pred_fallthru
      _
    %p288 = scmp.le.s32.totalorder 1, %s17
    %p289 = scmp.lt.s32.totalorder %s17, 3
    %p290 = pnand %p288, %p289
    %p291 = pneg %p290
    // Predicated region
    $region53: #{net_independent_forward.1} parent=5 // pred_check
      _
    $region54: #{net_independent_forward.1} parent=5 // pred_check_branch
      %293 = sbr.rel (%p290) target = $region56
    $region55: #{net_independent_forward.1} parent=5 // pred_region
      %s294 = ssub.s32 %s17, 1
      %s295 = smul.u32 4, %s22
      %p296 = scmp.lt.s32.totalorder %s295, 7
      %s297 = scalar_select %p296, %s295, 7
      %s298 = scalar_lea.vmem %s0, %s297
      %p299 = pneg %p43
      %p300 = pneg %p40
      %p301 = pneg %p64
      %p302 = pneg %p61
      %p303 = pneg %p85
      %p304 = pneg %p82
      %p305 = pneg %p106
      %p306 = pneg %p103
      %p307 = pneg %p127
      %p308 = pneg %p124
      %p309 = pneg %p148
      %p310 = pneg %p145
      %p311 = pneg %p169
      %p312 = pneg %p166
      %p313 = pneg %p190
      %p314 = pneg %p187
      %p315 = pneg %p211
      %p316 = pneg %p208
      %p317 = pneg %p237
      %p318 = pneg %p234
      %s319 = smul.u32 4, %s22
      %p320 = scmp.lt.s32.totalorder %s319, 7
      %s321 = scalar_select %p320, %s319, 7
      %s322 = scalar_lea.vmem %s9, %s321
      %s323 = smul.u32 4, %s22
      %p324 = scmp.lt.s32.totalorder %s323, 7
      %s325 = scalar_select %p324, %s323, 7
      %s326 = scalar_lea.vmem %s0, %s325
      %s327 = smul.u32 4, %s22
      %s328 = smul.u32 4, %s22
      %p329 = scmp.lt.s32.totalorder %s328, 7
      %s330 = scalar_select %p329, %s328, 7
      %s331 = scalar_lea.vmem %s9, %s330
      %s332 = smul.u32 4, %s22
      %v334 = vld [vmem:[%s326] sm:$0xf]
      %v335 = vld [vmem:[%s1] sm:$0xff]
      %v336 = vld [vmem:[%s1 + $0x8] sm:$0xff]
      %v337 = vld [vmem:[%s1 + $0x10] sm:$0xff]
      %v338 = vld [vmem:[%s1 + $0x18] sm:$0xff]
      %340 = vset.pattern.permute.xlu0 0
      %341 = vperm.xlu0 %340, %v335
      %v342 = vpop.permute.xlu0 %341
      %345 = vset.pattern.permute.xlu0 0
      %346 = vperm.xlu0 %345, %v336
      %v347 = vpop.permute.xlu0 %346
      %350 = vset.pattern.permute.xlu0 0
      %351 = vperm.xlu0 %350, %v337
      %v352 = vpop.permute.xlu0 %351
      %355 = vset.pattern.permute.xlu0 0
      %356 = vperm.xlu0 %355, %v338
      %v357 = vpop.permute.xlu0 %356
      %v360 = vlaneseq
      %v361 = vshrl.u32 %v360, 7
      %v362 = vsub.s32 0, %v361
      %v363 = vrot.slane %v334, %v362
      %v364 = vlaneseq
      %v365 = vshrl.u32 %v364, 7
      %v366 = vsub.s32 1, %v365
      %v367 = vrot.slane %v334, %v366
      %v368 = vlaneseq
      %v369 = vshrl.u32 %v368, 7
      %v370 = vsub.s32 2, %v369
      %v371 = vrot.slane %v334, %v370
      %v372 = vlaneseq
      %v373 = vshrl.u32 %v372, 7
      %v374 = vsub.s32 3, %v373
      %v375 = vrot.slane %v334, %v374
      %v380 = vmul.f32 %v342, %v363
      %v381 = vmul.f32 %v342, %v367
      %v382 = vmul.f32 %v342, %v371
      %v383 = vmul.f32 %v342, %v375
      %v384 = vmul.f32 %v347, %v363
      %v385 = vmul.f32 %v347, %v367
      %v386 = vmul.f32 %v347, %v371
      %v387 = vmul.f32 %v347, %v375
      %v388 = vmul.f32 %v352, %v363
      %v389 = vmul.f32 %v352, %v367
      %v390 = vmul.f32 %v352, %v371
      %v391 = vmul.f32 %v352, %v375
      %v392 = vmul.f32 %v357, %v363
      %v393 = vmul.f32 %v357, %v367
      %v394 = vmul.f32 %v357, %v371
      %v395 = vmul.f32 %v357, %v375
      %v396 = vld [vmem:[%s2] sm:$0xff]
      %v397 = vld [vmem:[%s2 + $0x8] sm:$0xff]
      %v398 = vld [vmem:[%s2 + $0x10] sm:$0xff]
      %v399 = vld [vmem:[%s2 + $0x18] sm:$0xff]
      %401 = vset.pattern.permute.xlu0 0
      %402 = vperm.xlu0 %401, %v396
      %v403 = vpop.permute.xlu0 %402
      %406 = vset.pattern.permute.xlu0 0
      %407 = vperm.xlu0 %406, %v397
      %v408 = vpop.permute.xlu0 %407
      %411 = vset.pattern.permute.xlu0 0
      %412 = vperm.xlu0 %411, %v398
      %v413 = vpop.permute.xlu0 %412
      %416 = vset.pattern.permute.xlu0 0
      %417 = vperm.xlu0 %416, %v399
      %v418 = vpop.permute.xlu0 %417
      %v420 = vadd.f32 %v380, %v403
      %v421 = vadd.f32 %v381, %v403
      %v422 = vadd.f32 %v382, %v403
      %v423 = vadd.f32 %v383, %v403
      %v424 = vadd.f32 %v384, %v408
      %v425 = vadd.f32 %v385, %v408
      %v426 = vadd.f32 %v386, %v408
      %v427 = vadd.f32 %v387, %v408
      %v428 = vadd.f32 %v388, %v413
      %v429 = vadd.f32 %v389, %v413
      %v430 = vadd.f32 %v390, %v413
      %v431 = vadd.f32 %v391, %v413
      %v432 = vadd.f32 %v392, %v418
      %v433 = vadd.f32 %v393, %v418
      %v434 = vadd.f32 %v394, %v418
      %v435 = vadd.f32 %v395, %v418
      %v436 = vmax.f32 %v420, 0.0
      %v437 = vmax.f32 %v421, 0.0
      %v438 = vmax.f32 %v422, 0.0
      %v439 = vmax.f32 %v423, 0.0
      %v440 = vmax.f32 %v424, 0.0
      %v441 = vmax.f32 %v425, 0.0
      %v442 = vmax.f32 %v426, 0.0
      %v443 = vmax.f32 %v427, 0.0
      %v444 = vmax.f32 %v428, 0.0
      %v445 = vmax.f32 %v429, 0.0
      %v446 = vmax.f32 %v430, 0.0
      %v447 = vmax.f32 %v431, 0.0
      %v448 = vmax.f32 %v432, 0.0
      %v449 = vmax.f32 %v433, 0.0
      %v450 = vmax.f32 %v434, 0.0
      %v451 = vmax.f32 %v435, 0.0
      %v452 = vld [vmem:[%s3] sm:$0xf]
      %v453 = vld [vmem:[%s3 + $0x4] sm:$0xf]
      %v454 = vld [vmem:[%s3 + $0x8] sm:$0xf]
      %v455 = vld [vmem:[%s3 + $0xc] sm:$0xf]
      %v456 = vld [vmem:[%s3 + $0x10] sm:$0xf]
      %v457 = vld [vmem:[%s3 + $0x14] sm:$0xf]
      %v458 = vld [vmem:[%s3 + $0x18] sm:$0xf]
      %v459 = vld [vmem:[%s3 + $0x1c] sm:$0xf]
      %v460 = vpack.c.bf16 %v440, %v436
      %v461 = vpack.c.bf16 %v441, %v437
      %v462 = vpack.c.bf16 %v442, %v438
      %v463 = vpack.c.bf16 %v443, %v439
      %v464 = vpack.c.bf16 %v448, %v444
      %v465 = vpack.c.bf16 %v449, %v445
      %v466 = vpack.c.bf16 %v450, %v446
      %v467 = vpack.c.bf16 %v451, %v447
      %v468 = vld [vmem:[%s4] sm:$0xff]
      %v469 = vld [vmem:[%s4 + $0x8] sm:$0xff]
      %v470 = vld [vmem:[%s4 + $0x10] sm:$0xff]
      %v471 = vld [vmem:[%s4 + $0x18] sm:$0xff]
      %v472 = vld [vmem:[%s4 + $0x20] sm:$0xff]
      %v473 = vld [vmem:[%s4 + $0x28] sm:$0xff]
      %v474 = vld [vmem:[%s4 + $0x30] sm:$0xff]
      %v475 = vld [vmem:[%s4 + $0x38] sm:$0xff]
      %477 = vset.pattern.permute.xlu0 0
      %478 = vperm.xlu0 %477, %v468
      %v479 = vpop.permute.xlu0 %478
      %482 = vset.pattern.permute.xlu0 0
      %483 = vperm.xlu0 %482, %v469
      %v484 = vpop.permute.xlu0 %483
      %487 = vset.pattern.permute.xlu0 0
      %488 = vperm.xlu0 %487, %v470
      %v489 = vpop.permute.xlu0 %488
      %492 = vset.pattern.permute.xlu0 0
      %493 = vperm.xlu0 %492, %v471
      %v494 = vpop.permute.xlu0 %493
      %497 = vset.pattern.permute.xlu0 0
      %498 = vperm.xlu0 %497, %v472
      %v499 = vpop.permute.xlu0 %498
      %502 = vset.pattern.permute.xlu0 0
      %503 = vperm.xlu0 %502, %v473
      %v504 = vpop.permute.xlu0 %503
      %507 = vset.pattern.permute.xlu0 0
      %508 = vperm.xlu0 %507, %v474
      %v509 = vpop.permute.xlu0 %508
      %512 = vset.pattern.permute.xlu0 0
      %513 = vperm.xlu0 %512, %v475
      %v514 = vpop.permute.xlu0 %513
      %v524 = vunpack.c.l.b16 %v452
      %v525 = vunpack.c.l.b16 %v453
      %v526 = vunpack.c.l.b16 %v454
      %v527 = vunpack.c.l.b16 %v455
      %v528 = vunpack.c.l.b16 %v456
      %v529 = vunpack.c.l.b16 %v457
      %v530 = vunpack.c.l.b16 %v458
      %v531 = vunpack.c.l.b16 %v459
      %v532 = vpack.c.b16 %v525, %v524
      %v533 = vpack.c.b16 %v527, %v526
      %v534 = vpack.c.b16 %v529, %v528
      %v535 = vpack.c.b16 %v531, %v530
      %vm536 = vcmask 261120
      %v538 = vsel %vm536, %v532, 0
      %v541 = vsel %vm536, %v533, 0
      %v544 = vsel %vm536, %v534, 0
      %v547 = vsel %vm536, %v535, 0
      %549 = vmatprep.subr.bf16.mxu0 0
      %550 = vmatpush1.bf16.msra.mxu0 0
      %551 = vmatprep.subr.bf16.mxu0 0
      %552 = vmatpush1.bf16.msra.mxu0 0
      %553 = vmatprep.subr.bf16.mxu0 0
      %554 = vmatpush1.bf16.msra.mxu0 0
      %555 = vmatprep.subr.bf16.mxu0 0
      %556 = vmatpush1.bf16.msra.mxu0 0
      %557 = vmatprep.subr.bf16.mxu0 0
      %558 = vmatpush1.bf16.msra.mxu0 0
      %559 = vmatprep.subr.bf16.mxu0 0
      %560 = vmatpush1.bf16.msra.mxu0 0
      %561 = vmatprep.subr.bf16.mxu0 %v465
      %562 = vmatpush1.bf16.msra.mxu0 %v464
      %563 = vmatprep.subr.bf16.mxu0 %v461
      %564 = vmatpush1.bf16.msra.mxu0 %v460
      %565 = vmatprep.subr.bf16.mxu0 0
      %566 = vmatpush2.bf16.msra.mxu0 0
      %567 = vmatprep.subr.bf16.mxu0 0
      %568 = vmatpush2.bf16.msra.mxu0 0
      %569 = vmatprep.subr.bf16.mxu0 0
      %570 = vmatpush2.bf16.msra.mxu0 0
      %571 = vmatprep.subr.bf16.mxu0 0
      %572 = vmatpush2.bf16.msra.mxu0 0
      %573 = vmatprep.subr.bf16.mxu0 0
      %574 = vmatpush2.bf16.msra.mxu0 0
      %575 = vmatprep.subr.bf16.mxu0 0
      %576 = vmatpush2.bf16.msra.mxu0 0
      %577 = vmatprep.subr.bf16.mxu0 0
      %578 = vmatpush2.bf16.msra.mxu0 0
      %579 = vmatprep.subr.bf16.mxu0 0
      %580 = vmatpush2.bf16.msra.mxu0 0
      %581 = vmatprep.mubr.bf16.mxu0 0
      %582 = vmatmul.mubr.bf16.gmra.mxu0 %v538
      %v583 = vpop.f32.mrf.mxu0
      %v584 = vadd.f32 %v479, %v583
      %v585 = vpop.f32.mrf.mxu0
      %v586 = vadd.f32 %v479, %v585
      %v587 = vpop.f32.mrf.mxu0
      %v588 = vadd.f32 %v484, %v587
      %v589 = vpop.f32.mrf.mxu0
      %v590 = vadd.f32 %v484, %v589
      %591 = vmatprep.mubr.bf16.mxu0 0
      %592 = vmatmul.mubr.bf16.gmra.mxu0 %v541
      %v593 = vpop.f32.mrf.mxu0
      %v594 = vadd.f32 %v489, %v593
      %v595 = vpop.f32.mrf.mxu0
      %v596 = vadd.f32 %v489, %v595
      %v597 = vpop.f32.mrf.mxu0
      %v598 = vadd.f32 %v494, %v597
      %v599 = vpop.f32.mrf.mxu0
      %v600 = vadd.f32 %v494, %v599
      %601 = vmatprep.mubr.bf16.mxu0 0
      %602 = vmatmul.mubr.bf16.gmra.mxu0 %v544
      %v603 = vpop.f32.mrf.mxu0
      %v604 = vadd.f32 %v499, %v603
      %v605 = vpop.f32.mrf.mxu0
      %v606 = vadd.f32 %v499, %v605
      %v607 = vpop.f32.mrf.mxu0
      %v608 = vadd.f32 %v504, %v607
      %v609 = vpop.f32.mrf.mxu0
      %v610 = vadd.f32 %v504, %v609
      %611 = vmatprep.mubr.bf16.mxu0 0
      %612 = vmatmul.mubr.bf16.gmra.mxu0 %v547
      %v613 = vpop.f32.mrf.mxu0
      %v614 = vadd.f32 %v509, %v613
      %v615 = vpop.f32.mrf.mxu0
      %v616 = vadd.f32 %v509, %v615
      %v617 = vpop.f32.mrf.mxu0
      %v618 = vadd.f32 %v514, %v617
      %v619 = vpop.f32.mrf.mxu0
      %v620 = vadd.f32 %v514, %v619
      %621 = vdwg.mxu0
      %622 = vmatprep.subr.bf16.mxu0 0
      %623 = vmatpush1.bf16.msra.mxu0 0
      %624 = vmatprep.subr.bf16.mxu0 0
      %625 = vmatpush1.bf16.msra.mxu0 0
      %626 = vmatprep.subr.bf16.mxu0 0
      %627 = vmatpush1.bf16.msra.mxu0 0
      %628 = vmatprep.subr.bf16.mxu0 0
      %629 = vmatpush1.bf16.msra.mxu0 0
      %630 = vmatprep.subr.bf16.mxu0 0
      %631 = vmatpush1.bf16.msra.mxu0 0
      %632 = vmatprep.subr.bf16.mxu0 0
      %633 = vmatpush1.bf16.msra.mxu0 0
      %634 = vmatprep.subr.bf16.mxu0 %v467
      %635 = vmatpush1.bf16.msra.mxu0 %v466
      %636 = vmatprep.subr.bf16.mxu0 %v463
      %637 = vmatpush1.bf16.msra.mxu0 %v462
      %638 = vmatprep.subr.bf16.mxu0 0
      %639 = vmatpush2.bf16.msra.mxu0 0
      %640 = vmatprep.subr.bf16.mxu0 0
      %641 = vmatpush2.bf16.msra.mxu0 0
      %642 = vmatprep.subr.bf16.mxu0 0
      %643 = vmatpush2.bf16.msra.mxu0 0
      %644 = vmatprep.subr.bf16.mxu0 0
      %645 = vmatpush2.bf16.msra.mxu0 0
      %646 = vmatprep.subr.bf16.mxu0 0
      %647 = vmatpush2.bf16.msra.mxu0 0
      %648 = vmatprep.subr.bf16.mxu0 0
      %649 = vmatpush2.bf16.msra.mxu0 0
      %650 = vmatprep.subr.bf16.mxu0 0
      %651 = vmatpush2.bf16.msra.mxu0 0
      %652 = vmatprep.subr.bf16.mxu0 0
      %653 = vmatpush2.bf16.msra.mxu0 0
      %654 = vmatprep.mubr.bf16.mxu0 0
      %655 = vmatmul.mubr.bf16.gmra.mxu0 %v538
      %v656 = vpop.f32.mrf.mxu0
      %v657 = vadd.f32 %v479, %v656
      %v658 = vpop.f32.mrf.mxu0
      %v659 = vadd.f32 %v479, %v658
      %v660 = vpop.f32.mrf.mxu0
      %v661 = vadd.f32 %v484, %v660
      %v662 = vpop.f32.mrf.mxu0
      %v663 = vadd.f32 %v484, %v662
      %664 = vmatprep.mubr.bf16.mxu0 0
      %665 = vmatmul.mubr.bf16.gmra.mxu0 %v541
      %v666 = vpop.f32.mrf.mxu0
      %v667 = vadd.f32 %v489, %v666
      %v668 = vpop.f32.mrf.mxu0
      %v669 = vadd.f32 %v489, %v668
      %v670 = vpop.f32.mrf.mxu0
      %v671 = vadd.f32 %v494, %v670
      %v672 = vpop.f32.mrf.mxu0
      %v673 = vadd.f32 %v494, %v672
      %674 = vmatprep.mubr.bf16.mxu0 0
      %675 = vmatmul.mubr.bf16.gmra.mxu0 %v544
      %v676 = vpop.f32.mrf.mxu0
      %v677 = vadd.f32 %v499, %v676
      %v678 = vpop.f32.mrf.mxu0
      %v679 = vadd.f32 %v499, %v678
      %v680 = vpop.f32.mrf.mxu0
      %v681 = vadd.f32 %v504, %v680
      %v682 = vpop.f32.mrf.mxu0
      %v683 = vadd.f32 %v504, %v682
      %684 = vmatprep.mubr.bf16.mxu0 0
      %685 = vmatmul.mubr.bf16.gmra.mxu0 %v547
      %v686 = vpop.f32.mrf.mxu0
      %v687 = vadd.f32 %v509, %v686
      %v688 = vpop.f32.mrf.mxu0
      %v689 = vadd.f32 %v509, %v688
      %v690 = vpop.f32.mrf.mxu0
      %v691 = vadd.f32 %v514, %v690
      %v692 = vpop.f32.mrf.mxu0
      %v693 = vadd.f32 %v514, %v692
      %694 = vdwg.mxu0
      %v695 = vmax.f32 %v584, 0.0
      %v696 = vmax.f32 %v586, 0.0
      %v697 = vmax.f32 %v657, 0.0
      %v698 = vmax.f32 %v659, 0.0
      %v699 = vmax.f32 %v588, 0.0
      %v700 = vmax.f32 %v590, 0.0
      %v701 = vmax.f32 %v661, 0.0
      %v702 = vmax.f32 %v663, 0.0
      %v703 = vmax.f32 %v594, 0.0
      %v704 = vmax.f32 %v596, 0.0
      %v705 = vmax.f32 %v667, 0.0
      %v706 = vmax.f32 %v669, 0.0
      %v707 = vmax.f32 %v598, 0.0
      %v708 = vmax.f32 %v600, 0.0
      %v709 = vmax.f32 %v671, 0.0
      %v710 = vmax.f32 %v673, 0.0
      %v711 = vmax.f32 %v604, 0.0
      %v712 = vmax.f32 %v606, 0.0
      %v713 = vmax.f32 %v677, 0.0
      %v714 = vmax.f32 %v679, 0.0
      %v715 = vmax.f32 %v608, 0.0
      %v716 = vmax.f32 %v610, 0.0
      %v717 = vmax.f32 %v681, 0.0
      %v718 = vmax.f32 %v683, 0.0
      %v719 = vmax.f32 %v614, 0.0
      %v720 = vmax.f32 %v616, 0.0
      %v721 = vmax.f32 %v687, 0.0
      %v722 = vmax.f32 %v689, 0.0
      %v723 = vmax.f32 %v618, 0.0
      %v724 = vmax.f32 %v620, 0.0
      %v725 = vmax.f32 %v691, 0.0
      %v726 = vmax.f32 %v693, 0.0
      %v727 = vld [vmem:[%s5] sm:$0xf]
      %v728 = vld [vmem:[%s5 + $0x4] sm:$0xf]
      %v729 = vld [vmem:[%s5 + $0x8] sm:$0xf]
      %v730 = vld [vmem:[%s5 + $0xc] sm:$0xf]
      %v731 = vld [vmem:[%s5 + $0x10] sm:$0xf]
      %v732 = vld [vmem:[%s5 + $0x14] sm:$0xf]
      %v733 = vld [vmem:[%s5 + $0x18] sm:$0xf]
      %v734 = vld [vmem:[%s5 + $0x1c] sm:$0xf]
      %v735 = vld [vmem:[%s5 + $0x20] sm:$0xf]
      %v736 = vld [vmem:[%s5 + $0x24] sm:$0xf]
      %v737 = vld [vmem:[%s5 + $0x28] sm:$0xf]
      %v738 = vld [vmem:[%s5 + $0x2c] sm:$0xf]
      %v739 = vld [vmem:[%s5 + $0x30] sm:$0xf]
      %v740 = vld [vmem:[%s5 + $0x34] sm:$0xf]
      %v741 = vld [vmem:[%s5 + $0x38] sm:$0xf]
      %v742 = vld [vmem:[%s5 + $0x3c] sm:$0xf]
      %v743 = vpack.c.bf16 %v699, %v695
      %v744 = vpack.c.bf16 %v700, %v696
      %v745 = vpack.c.bf16 %v701, %v697
      %v746 = vpack.c.bf16 %v702, %v698
      %v747 = vpack.c.bf16 %v707, %v703
      %v748 = vpack.c.bf16 %v708, %v704
      %v749 = vpack.c.bf16 %v709, %v705
      %v750 = vpack.c.bf16 %v710, %v706
      %v751 = vpack.c.bf16 %v715, %v711
      %v752 = vpack.c.bf16 %v716, %v712
      %v753 = vpack.c.bf16 %v717, %v713
      %v754 = vpack.c.bf16 %v718, %v714
      %v755 = vpack.c.bf16 %v723, %v719
      %v756 = vpack.c.bf16 %v724, %v720
      %v757 = vpack.c.bf16 %v725, %v721
      %v758 = vpack.c.bf16 %v726, %v722
      %v759 = vld [vmem:[%s6] sm:$0xff]
      %v760 = vld [vmem:[%s6 + $0x8] sm:$0xff]
      %v761 = vld [vmem:[%s6 + $0x10] sm:$0xff]
      %v762 = vld [vmem:[%s6 + $0x18] sm:$0xff]
      %v763 = vld [vmem:[%s6 + $0x20] sm:$0xff]
      %v764 = vld [vmem:[%s6 + $0x28] sm:$0xff]
      %v765 = vld [vmem:[%s6 + $0x30] sm:$0xff]
      %v766 = vld [vmem:[%s6 + $0x38] sm:$0xff]
      %v767 = vld [vmem:[%s6 + $0x40] sm:$0xff]
      %v768 = vld [vmem:[%s6 + $0x48] sm:$0xff]
      %v769 = vld [vmem:[%s6 + $0x50] sm:$0xff]
      %v770 = vld [vmem:[%s6 + $0x58] sm:$0xff]
      %v771 = vld [vmem:[%s6 + $0x60] sm:$0xff]
      %v772 = vld [vmem:[%s6 + $0x68] sm:$0xff]
      %v773 = vld [vmem:[%s6 + $0x70] sm:$0xff]
      %v774 = vld [vmem:[%s6 + $0x78] sm:$0xff]
      %776 = vset.pattern.permute.xlu0 0
      %777 = vperm.xlu0 %776, %v759
      %v778 = vpop.permute.xlu0 %777
      %781 = vset.pattern.permute.xlu0 0
      %782 = vperm.xlu0 %781, %v760
      %v783 = vpop.permute.xlu0 %782
      %786 = vset.pattern.permute.xlu0 0
      %787 = vperm.xlu0 %786, %v761
      %v788 = vpop.permute.xlu0 %787
      %791 = vset.pattern.permute.xlu0 0
      %792 = vperm.xlu0 %791, %v762
      %v793 = vpop.permute.xlu0 %792
      %796 = vset.pattern.permute.xlu0 0
      %797 = vperm.xlu0 %796, %v763
      %v798 = vpop.permute.xlu0 %797
      %801 = vset.pattern.permute.xlu0 0
      %802 = vperm.xlu0 %801, %v764
      %v803 = vpop.permute.xlu0 %802
      %806 = vset.pattern.permute.xlu0 0
      %807 = vperm.xlu0 %806, %v765
      %v808 = vpop.permute.xlu0 %807
      %811 = vset.pattern.permute.xlu0 0
      %812 = vperm.xlu0 %811, %v766
      %v813 = vpop.permute.xlu0 %812
      %816 = vset.pattern.permute.xlu0 0
      %817 = vperm.xlu0 %816, %v767
      %v818 = vpop.permute.xlu0 %817
      %821 = vset.pattern.permute.xlu0 0
      %822 = vperm.xlu0 %821, %v768
      %v823 = vpop.permute.xlu0 %822
      %826 = vset.pattern.permute.xlu0 0
      %827 = vperm.xlu0 %826, %v769
      %v828 = vpop.permute.xlu0 %827
      %831 = vset.pattern.permute.xlu0 0
      %832 = vperm.xlu0 %831, %v770
      %v833 = vpop.permute.xlu0 %832
      %836 = vset.pattern.permute.xlu0 0
      %837 = vperm.xlu0 %836, %v771
      %v838 = vpop.permute.xlu0 %837
      %841 = vset.pattern.permute.xlu0 0
      %842 = vperm.xlu0 %841, %v772
      %v843 = vpop.permute.xlu0 %842
      %846 = vset.pattern.permute.xlu0 0
      %847 = vperm.xlu0 %846, %v773
      %v848 = vpop.permute.xlu0 %847
      %851 = vset.pattern.permute.xlu0 0
      %852 = vperm.xlu0 %851, %v774
      %v853 = vpop.permute.xlu0 %852
      %v871 = vunpack.c.l.b16 %v727
      %v872 = vunpack.c.l.b16 %v728
      %v873 = vunpack.c.l.b16 %v729
      %v874 = vunpack.c.l.b16 %v730
      %v875 = vunpack.c.l.b16 %v731
      %v876 = vunpack.c.l.b16 %v732
      %v877 = vunpack.c.l.b16 %v733
      %v878 = vunpack.c.l.b16 %v734
      %v879 = vunpack.c.l.b16 %v735
      %v880 = vunpack.c.l.b16 %v736
      %v881 = vunpack.c.l.b16 %v737
      %v882 = vunpack.c.l.b16 %v738
      %v883 = vunpack.c.l.b16 %v739
      %v884 = vunpack.c.l.b16 %v740
      %v885 = vunpack.c.l.b16 %v741
      %v886 = vunpack.c.l.b16 %v742
      %v887 = vpack.c.b16 %v872, %v871
      %v888 = vpack.c.b16 %v874, %v873
      %v889 = vpack.c.b16 %v876, %v875
      %v890 = vpack.c.b16 %v878, %v877
      %v891 = vpack.c.b16 %v880, %v879
      %v892 = vpack.c.b16 %v882, %v881
      %v893 = vpack.c.b16 %v884, %v883
      %v894 = vpack.c.b16 %v886, %v885
      %vm895 = vcmask 523264
      %v897 = vsel %vm895, %v887, 0
      %v900 = vsel %vm895, %v888, 0
      %v903 = vsel %vm895, %v889, 0
      %v906 = vsel %vm895, %v890, 0
      %v909 = vsel %vm895, %v891, 0
      %v912 = vsel %vm895, %v892, 0
      %v915 = vsel %vm895, %v893, 0
      %v918 = vsel %vm895, %v894, 0
      %920 = vmatprep.subr.bf16.mxu0 0
      %921 = vmatpush1.bf16.msra.mxu0 0
      %922 = vmatprep.subr.bf16.mxu0 0
      %923 = vmatpush1.bf16.msra.mxu0 0
      %924 = vmatprep.subr.bf16.mxu0 0
      %925 = vmatpush1.bf16.msra.mxu0 0
      %926 = vmatprep.subr.bf16.mxu0 0
      %927 = vmatpush1.bf16.msra.mxu0 0
      %928 = vmatprep.subr.bf16.mxu0 %v756
      %929 = vmatpush1.bf16.msra.mxu0 %v755
      %930 = vmatprep.subr.bf16.mxu0 %v752
      %931 = vmatpush1.bf16.msra.mxu0 %v751
      %932 = vmatprep.subr.bf16.mxu0 %v748
      %933 = vmatpush1.bf16.msra.mxu0 %v747
      %934 = vmatprep.subr.bf16.mxu0 %v744
      %935 = vmatpush1.bf16.msra.mxu0 %v743
      %936 = vmatprep.subr.bf16.mxu0 0
      %937 = vmatpush2.bf16.msra.mxu0 0
      %938 = vmatprep.subr.bf16.mxu0 0
      %939 = vmatpush2.bf16.msra.mxu0 0
      %940 = vmatprep.subr.bf16.mxu0 0
      %941 = vmatpush2.bf16.msra.mxu0 0
      %942 = vmatprep.subr.bf16.mxu0 0
      %943 = vmatpush2.bf16.msra.mxu0 0
      %944 = vmatprep.subr.bf16.mxu0 0
      %945 = vmatpush2.bf16.msra.mxu0 0
      %946 = vmatprep.subr.bf16.mxu0 0
      %947 = vmatpush2.bf16.msra.mxu0 0
      %948 = vmatprep.subr.bf16.mxu0 0
      %949 = vmatpush2.bf16.msra.mxu0 0
      %950 = vmatprep.subr.bf16.mxu0 0
      %951 = vmatpush2.bf16.msra.mxu0 0
      %952 = vmatprep.mubr.bf16.mxu0 0
      %953 = vmatmul.mubr.bf16.gmra.mxu0 %v897
      %v954 = vpop.f32.mrf.mxu0
      %v955 = vadd.f32 %v778, %v954
      %v956 = vpop.f32.mrf.mxu0
      %v957 = vadd.f32 %v778, %v956
      %v958 = vpop.f32.mrf.mxu0
      %v959 = vadd.f32 %v783, %v958
      %v960 = vpop.f32.mrf.mxu0
      %v961 = vadd.f32 %v783, %v960
      %962 = vmatprep.mubr.bf16.mxu0 0
      %963 = vmatmul.mubr.bf16.gmra.mxu0 %v900
      %v964 = vpop.f32.mrf.mxu0
      %v965 = vadd.f32 %v788, %v964
      %v966 = vpop.f32.mrf.mxu0
      %v967 = vadd.f32 %v788, %v966
      %v968 = vpop.f32.mrf.mxu0
      %v969 = vadd.f32 %v793, %v968
      %v970 = vpop.f32.mrf.mxu0
      %v971 = vadd.f32 %v793, %v970
      %972 = vmatprep.mubr.bf16.mxu0 0
      %973 = vmatmul.mubr.bf16.gmra.mxu0 %v903
      %v974 = vpop.f32.mrf.mxu0
      %v975 = vadd.f32 %v798, %v974
      %v976 = vpop.f32.mrf.mxu0
      %v977 = vadd.f32 %v798, %v976
      %v978 = vpop.f32.mrf.mxu0
      %v979 = vadd.f32 %v803, %v978
      %v980 = vpop.f32.mrf.mxu0
      %v981 = vadd.f32 %v803, %v980
      %982 = vmatprep.mubr.bf16.mxu0 0
      %983 = vmatmul.mubr.bf16.gmra.mxu0 %v906
      %v984 = vpop.f32.mrf.mxu0
      %v985 = vadd.f32 %v808, %v984
      %v986 = vpop.f32.mrf.mxu0
      %v987 = vadd.f32 %v808, %v986
      %v988 = vpop.f32.mrf.mxu0
      %v989 = vadd.f32 %v813, %v988
      %v990 = vpop.f32.mrf.mxu0
      %v991 = vadd.f32 %v813, %v990
      %992 = vmatprep.mubr.bf16.mxu0 0
      %993 = vmatmul.mubr.bf16.gmra.mxu0 %v909
      %v994 = vpop.f32.mrf.mxu0
      %v995 = vadd.f32 %v818, %v994
      %v996 = vpop.f32.mrf.mxu0
      %v997 = vadd.f32 %v818, %v996
      %v998 = vpop.f32.mrf.mxu0
      %v999 = vadd.f32 %v823, %v998
      %v1000 = vpop.f32.mrf.mxu0
      %v1001 = vadd.f32 %v823, %v1000
      %1002 = vmatprep.mubr.bf16.mxu0 0
      %1003 = vmatmul.mubr.bf16.gmra.mxu0 %v912
      %v1004 = vpop.f32.mrf.mxu0
      %v1005 = vadd.f32 %v828, %v1004
      %v1006 = vpop.f32.mrf.mxu0
      %v1007 = vadd.f32 %v828, %v1006
      %v1008 = vpop.f32.mrf.mxu0
      %v1009 = vadd.f32 %v833, %v1008
      %v1010 = vpop.f32.mrf.mxu0
      %v1011 = vadd.f32 %v833, %v1010
      %1012 = vmatprep.mubr.bf16.mxu0 0
      %1013 = vmatmul.mubr.bf16.gmra.mxu0 %v915
      %v1014 = vpop.f32.mrf.mxu0
      %v1015 = vadd.f32 %v838, %v1014
      %v1016 = vpop.f32.mrf.mxu0
      %v1017 = vadd.f32 %v838, %v1016
      %v1018 = vpop.f32.mrf.mxu0
      %v1019 = vadd.f32 %v843, %v1018
      %v1020 = vpop.f32.mrf.mxu0
      %v1021 = vadd.f32 %v843, %v1020
      %1022 = vmatprep.mubr.bf16.mxu0 0
      %1023 = vmatmul.mubr.bf16.gmra.mxu0 %v918
      %v1024 = vpop.f32.mrf.mxu0
      %v1025 = vadd.f32 %v848, %v1024
      %v1026 = vpop.f32.mrf.mxu0
      %v1027 = vadd.f32 %v848, %v1026
      %v1028 = vpop.f32.mrf.mxu0
      %v1029 = vadd.f32 %v853, %v1028
      %v1030 = vpop.f32.mrf.mxu0
      %v1031 = vadd.f32 %v853, %v1030
      %1032 = vdwg.mxu0
      %1033 = vmatprep.subr.bf16.mxu0 0
      %1034 = vmatpush1.bf16.msra.mxu0 0
      %1035 = vmatprep.subr.bf16.mxu0 0
      %1036 = vmatpush1.bf16.msra.mxu0 0
      %1037 = vmatprep.subr.bf16.mxu0 0
      %1038 = vmatpush1.bf16.msra.mxu0 0
      %1039 = vmatprep.subr.bf16.mxu0 0
      %1040 = vmatpush1.bf16.msra.mxu0 0
      %1041 = vmatprep.subr.bf16.mxu0 %v758
      %1042 = vmatpush1.bf16.msra.mxu0 %v757
      %1043 = vmatprep.subr.bf16.mxu0 %v754
      %1044 = vmatpush1.bf16.msra.mxu0 %v753
      %1045 = vmatprep.subr.bf16.mxu0 %v750
      %1046 = vmatpush1.bf16.msra.mxu0 %v749
      %1047 = vmatprep.subr.bf16.mxu0 %v746
      %1048 = vmatpush1.bf16.msra.mxu0 %v745
      %1049 = vmatprep.subr.bf16.mxu0 0
      %1050 = vmatpush2.bf16.msra.mxu0 0
      %1051 = vmatprep.subr.bf16.mxu0 0
      %1052 = vmatpush2.bf16.msra.mxu0 0
      %1053 = vmatprep.subr.bf16.mxu0 0
      %1054 = vmatpush2.bf16.msra.mxu0 0
      %1055 = vmatprep.subr.bf16.mxu0 0
      %1056 = vmatpush2.bf16.msra.mxu0 0
      %1057 = vmatprep.subr.bf16.mxu0 0
      %1058 = vmatpush2.bf16.msra.mxu0 0
      %1059 = vmatprep.subr.bf16.mxu0 0
      %1060 = vmatpush2.bf16.msra.mxu0 0
      %1061 = vmatprep.subr.bf16.mxu0 0
      %1062 = vmatpush2.bf16.msra.mxu0 0
      %1063 = vmatprep.subr.bf16.mxu0 0
      %1064 = vmatpush2.bf16.msra.mxu0 0
      %1065 = vmatprep.mubr.bf16.mxu0 0
      %1066 = vmatmul.mubr.bf16.gmra.mxu0 %v897
      %v1067 = vpop.f32.mrf.mxu0
      %v1068 = vadd.f32 %v778, %v1067
      %v1069 = vpop.f32.mrf.mxu0
      %v1070 = vadd.f32 %v778, %v1069
      %v1071 = vpop.f32.mrf.mxu0
      %v1072 = vadd.f32 %v783, %v1071
      %v1073 = vpop.f32.mrf.mxu0
      %v1074 = vadd.f32 %v783, %v1073
      %1075 = vmatprep.mubr.bf16.mxu0 0
      %1076 = vmatmul.mubr.bf16.gmra.mxu0 %v900
      %v1077 = vpop.f32.mrf.mxu0
      %v1078 = vadd.f32 %v788, %v1077
      %v1079 = vpop.f32.mrf.mxu0
      %v1080 = vadd.f32 %v788, %v1079
      %v1081 = vpop.f32.mrf.mxu0
      %v1082 = vadd.f32 %v793, %v1081
      %v1083 = vpop.f32.mrf.mxu0
      %v1084 = vadd.f32 %v793, %v1083
      %1085 = vmatprep.mubr.bf16.mxu0 0
      %1086 = vmatmul.mubr.bf16.gmra.mxu0 %v903
      %v1087 = vpop.f32.mrf.mxu0
      %v1088 = vadd.f32 %v798, %v1087
      %v1089 = vpop.f32.mrf.mxu0
      %v1090 = vadd.f32 %v798, %v1089
      %v1091 = vpop.f32.mrf.mxu0
      %v1092 = vadd.f32 %v803, %v1091
      %v1093 = vpop.f32.mrf.mxu0
      %v1094 = vadd.f32 %v803, %v1093
      %1095 = vmatprep.mubr.bf16.mxu0 0
      %1096 = vmatmul.mubr.bf16.gmra.mxu0 %v906
      %v1097 = vpop.f32.mrf.mxu0
      %v1098 = vadd.f32 %v808, %v1097
      %v1099 = vpop.f32.mrf.mxu0
      %v1100 = vadd.f32 %v808, %v1099
      %v1101 = vpop.f32.mrf.mxu0
      %v1102 = vadd.f32 %v813, %v1101
      %v1103 = vpop.f32.mrf.mxu0
      %v1104 = vadd.f32 %v813, %v1103
      %1105 = vmatprep.mubr.bf16.mxu0 0
      %1106 = vmatmul.mubr.bf16.gmra.mxu0 %v909
      %v1107 = vpop.f32.mrf.mxu0
      %v1108 = vadd.f32 %v818, %v1107
      %v1109 = vpop.f32.mrf.mxu0
      %v1110 = vadd.f32 %v818, %v1109
      %v1111 = vpop.f32.mrf.mxu0
      %v1112 = vadd.f32 %v823, %v1111
      %v1113 = vpop.f32.mrf.mxu0
      %v1114 = vadd.f32 %v823, %v1113
      %1115 = vmatprep.mubr.bf16.mxu0 0
      %1116 = vmatmul.mubr.bf16.gmra.mxu0 %v912
      %v1117 = vpop.f32.mrf.mxu0
      %v1118 = vadd.f32 %v828, %v1117
      %v1119 = vpop.f32.mrf.mxu0
      %v1120 = vadd.f32 %v828, %v1119
      %v1121 = vpop.f32.mrf.mxu0
      %v1122 = vadd.f32 %v833, %v1121
      %v1123 = vpop.f32.mrf.mxu0
      %v1124 = vadd.f32 %v833, %v1123
      %1125 = vmatprep.mubr.bf16.mxu0 0
      %1126 = vmatmul.mubr.bf16.gmra.mxu0 %v915
      %v1127 = vpop.f32.mrf.mxu0
      %v1128 = vadd.f32 %v838, %v1127
      %v1129 = vpop.f32.mrf.mxu0
      %v1130 = vadd.f32 %v838, %v1129
      %v1131 = vpop.f32.mrf.mxu0
      %v1132 = vadd.f32 %v843, %v1131
      %v1133 = vpop.f32.mrf.mxu0
      %v1134 = vadd.f32 %v843, %v1133
      %1135 = vmatprep.mubr.bf16.mxu0 0
      %1136 = vmatmul.mubr.bf16.gmra.mxu0 %v918
      %v1137 = vpop.f32.mrf.mxu0
      %v1138 = vadd.f32 %v848, %v1137
      %v1139 = vpop.f32.mrf.mxu0
      %v1140 = vadd.f32 %v848, %v1139
      %v1141 = vpop.f32.mrf.mxu0
      %v1142 = vadd.f32 %v853, %v1141
      %v1143 = vpop.f32.mrf.mxu0
      %v1144 = vadd.f32 %v853, %v1143
      %1145 = vdwg.mxu0
      %v1146 = vmax.f32 %v955, 0.0
      %v1147 = vmax.f32 %v957, 0.0
      %v1148 = vmax.f32 %v1068, 0.0
      %v1149 = vmax.f32 %v1070, 0.0
      %v1150 = vmax.f32 %v959, 0.0
      %v1151 = vmax.f32 %v961, 0.0
      %v1152 = vmax.f32 %v1072, 0.0
      %v1153 = vmax.f32 %v1074, 0.0
      %v1154 = vmax.f32 %v965, 0.0
      %v1155 = vmax.f32 %v967, 0.0
      %v1156 = vmax.f32 %v1078, 0.0
      %v1157 = vmax.f32 %v1080, 0.0
      %v1158 = vmax.f32 %v969, 0.0
      %v1159 = vmax.f32 %v971, 0.0
      %v1160 = vmax.f32 %v1082, 0.0
      %v1161 = vmax.f32 %v1084, 0.0
      %v1162 = vmax.f32 %v975, 0.0
      %v1163 = vmax.f32 %v977, 0.0
      %v1164 = vmax.f32 %v1088, 0.0
      %v1165 = vmax.f32 %v1090, 0.0
      %v1166 = vmax.f32 %v979, 0.0
      %v1167 = vmax.f32 %v981, 0.0
      %v1168 = vmax.f32 %v1092, 0.0
      %v1169 = vmax.f32 %v1094, 0.0
      %v1170 = vmax.f32 %v985, 0.0
      %v1171 = vmax.f32 %v987, 0.0
      %v1172 = vmax.f32 %v1098, 0.0
      %v1173 = vmax.f32 %v1100, 0.0
      %v1174 = vmax.f32 %v989, 0.0
      %v1175 = vmax.f32 %v991, 0.0
      %v1176 = vmax.f32 %v1102, 0.0
      %v1177 = vmax.f32 %v1104, 0.0
      %v1178 = vmax.f32 %v995, 0.0
      %v1179 = vmax.f32 %v997, 0.0
      %v1180 = vmax.f32 %v1108, 0.0
      %v1181 = vmax.f32 %v1110, 0.0
      %v1182 = vmax.f32 %v999, 0.0
      %v1183 = vmax.f32 %v1001, 0.0
      %v1184 = vmax.f32 %v1112, 0.0
      %v1185 = vmax.f32 %v1114, 0.0
      %v1186 = vmax.f32 %v1005, 0.0
      %v1187 = vmax.f32 %v1007, 0.0
      %v1188 = vmax.f32 %v1118, 0.0
      %v1189 = vmax.f32 %v1120, 0.0
      %v1190 = vmax.f32 %v1009, 0.0
      %v1191 = vmax.f32 %v1011, 0.0
      %v1192 = vmax.f32 %v1122, 0.0
      %v1193 = vmax.f32 %v1124, 0.0
      %v1194 = vmax.f32 %v1015, 0.0
      %v1195 = vmax.f32 %v1017, 0.0
      %v1196 = vmax.f32 %v1128, 0.0
      %v1197 = vmax.f32 %v1130, 0.0
      %v1198 = vmax.f32 %v1019, 0.0
      %v1199 = vmax.f32 %v1021, 0.0
      %v1200 = vmax.f32 %v1132, 0.0
      %v1201 = vmax.f32 %v1134, 0.0
      %v1202 = vmax.f32 %v1025, 0.0
      %v1203 = vmax.f32 %v1027, 0.0
      %v1204 = vmax.f32 %v1138, 0.0
      %v1205 = vmax.f32 %v1140, 0.0
      %v1206 = vmax.f32 %v1029, 0.0
      %v1207 = vmax.f32 %v1031, 0.0
      %v1208 = vmax.f32 %v1142, 0.0
      %v1209 = vmax.f32 %v1144, 0.0
      %v1210 = vld [vmem:[%s7] sm:$0x1]
      %v1211 = vpack.c.bf16 %v1150, %v1146
      %v1212 = vpack.c.bf16 %v1151, %v1147
      %v1213 = vpack.c.bf16 %v1152, %v1148
      %v1214 = vpack.c.bf16 %v1153, %v1149
      %v1215 = vpack.c.bf16 %v1158, %v1154
      %v1216 = vpack.c.bf16 %v1159, %v1155
      %v1217 = vpack.c.bf16 %v1160, %v1156
      %v1218 = vpack.c.bf16 %v1161, %v1157
      %v1219 = vpack.c.bf16 %v1166, %v1162
      %v1220 = vpack.c.bf16 %v1167, %v1163
      %v1221 = vpack.c.bf16 %v1168, %v1164
      %v1222 = vpack.c.bf16 %v1169, %v1165
      %v1223 = vpack.c.bf16 %v1174, %v1170
      %v1224 = vpack.c.bf16 %v1175, %v1171
      %v1225 = vpack.c.bf16 %v1176, %v1172
      %v1226 = vpack.c.bf16 %v1177, %v1173
      %v1227 = vpack.c.bf16 %v1182, %v1178
      %v1228 = vpack.c.bf16 %v1183, %v1179
      %v1229 = vpack.c.bf16 %v1184, %v1180
      %v1230 = vpack.c.bf16 %v1185, %v1181
      %v1231 = vpack.c.bf16 %v1190, %v1186
      %v1232 = vpack.c.bf16 %v1191, %v1187
      %v1233 = vpack.c.bf16 %v1192, %v1188
      %v1234 = vpack.c.bf16 %v1193, %v1189
      %v1235 = vpack.c.bf16 %v1198, %v1194
      %v1236 = vpack.c.bf16 %v1199, %v1195
      %v1237 = vpack.c.bf16 %v1200, %v1196
      %v1238 = vpack.c.bf16 %v1201, %v1197
      %v1239 = vpack.c.bf16 %v1206, %v1202
      %v1240 = vpack.c.bf16 %v1207, %v1203
      %v1241 = vpack.c.bf16 %v1208, %v1204
      %v1242 = vpack.c.bf16 %v1209, %v1205
      %v1243 = vld [vmem:[#allocation2] sm:$0x1]
      %1245 = vset.pattern.permute.xlu0 0
      %1246 = vperm.xlu0 %1245, %v1243
      %v1247 = vpop.permute.xlu0 %1246
      %v1249 = vlaneseq
      %v1250 = vshrl.u32 %v1249, 7
      %v1251 = vsub.s32 0, %v1250
      %v1252 = vrot.slane %v1247, %v1251
      %1253 = vmatprep.subr.bf16.mxu0 %v1240
      %1254 = vmatpush1.bf16.msra.mxu0 %v1239
      %1255 = vmatprep.subr.bf16.mxu0 %v1236
      %1256 = vmatpush1.bf16.msra.mxu0 %v1235
      %1257 = vmatprep.subr.bf16.mxu0 %v1232
      %1258 = vmatpush1.bf16.msra.mxu0 %v1231
      %1259 = vmatprep.subr.bf16.mxu0 %v1228
      %1260 = vmatpush1.bf16.msra.mxu0 %v1227
      %1261 = vmatprep.subr.bf16.mxu0 %v1224
      %1262 = vmatpush1.bf16.msra.mxu0 %v1223
      %1263 = vmatprep.subr.bf16.mxu0 %v1220
      %1264 = vmatpush1.bf16.msra.mxu0 %v1219
      %1265 = vmatprep.subr.bf16.mxu0 %v1216
      %1266 = vmatpush1.bf16.msra.mxu0 %v1215
      %1267 = vmatprep.subr.bf16.mxu0 %v1212
      %1268 = vmatpush1.bf16.msra.mxu0 %v1211
      %1269 = vmatprep.subr.bf16.mxu0 0
      %1270 = vmatpush2.bf16.msra.mxu0 0
      %1271 = vmatprep.subr.bf16.mxu0 0
      %1272 = vmatpush2.bf16.msra.mxu0 0
      %1273 = vmatprep.subr.bf16.mxu0 0
      %1274 = vmatpush2.bf16.msra.mxu0 0
      %1275 = vmatprep.subr.bf16.mxu0 0
      %1276 = vmatpush2.bf16.msra.mxu0 0
      %1277 = vmatprep.subr.bf16.mxu0 0
      %1278 = vmatpush2.bf16.msra.mxu0 0
      %1279 = vmatprep.subr.bf16.mxu0 0
      %1280 = vmatpush2.bf16.msra.mxu0 0
      %1281 = vmatprep.subr.bf16.mxu0 0
      %1282 = vmatpush2.bf16.msra.mxu0 0
      %1283 = vmatprep.subr.bf16.mxu0 0
      %1284 = vmatpush2.bf16.msra.mxu0 0
      %1285 = vmatprep.mubr.bf16.mxu0 0
      %1286 = vmatmul.mubr.bf16.gmra.mxu0 %v1210
      %v1287 = vpop.f32.mrf.mxu0
      %v1288 = vadd.f32 %v1252, %v1287
      %v1289 = vpop.f32.mrf.mxu0
      %v1290 = vadd.f32 %v1252, %v1289
      %v1291 = vpop.f32.mrf.mxu0
      %v1292 = vpop.f32.mrf.mxu0
      %1293 = vdwg.mxu0
      %1294 = vmatprep.subr.bf16.mxu0 %v1242
      %1295 = vmatpush1.bf16.msra.mxu0 %v1241
      %1296 = vmatprep.subr.bf16.mxu0 %v1238
      %1297 = vmatpush1.bf16.msra.mxu0 %v1237
      %1298 = vmatprep.subr.bf16.mxu0 %v1234
      %1299 = vmatpush1.bf16.msra.mxu0 %v1233
      %1300 = vmatprep.subr.bf16.mxu0 %v1230
      %1301 = vmatpush1.bf16.msra.mxu0 %v1229
      %1302 = vmatprep.subr.bf16.mxu0 %v1226
      %1303 = vmatpush1.bf16.msra.mxu0 %v1225
      %1304 = vmatprep.subr.bf16.mxu0 %v1222
      %1305 = vmatpush1.bf16.msra.mxu0 %v1221
      %1306 = vmatprep.subr.bf16.mxu0 %v1218
      %1307 = vmatpush1.bf16.msra.mxu0 %v1217
      %1308 = vmatprep.subr.bf16.mxu0 %v1214
      %1309 = vmatpush1.bf16.msra.mxu0 %v1213
      %1310 = vmatprep.subr.bf16.mxu0 0
      %1311 = vmatpush2.bf16.msra.mxu0 0
      %1312 = vmatprep.subr.bf16.mxu0 0
      %1313 = vmatpush2.bf16.msra.mxu0 0
      %1314 = vmatprep.subr.bf16.mxu0 0
      %1315 = vmatpush2.bf16.msra.mxu0 0
      %1316 = vmatprep.subr.bf16.mxu0 0
      %1317 = vmatpush2.bf16.msra.mxu0 0
      %1318 = vmatprep.subr.bf16.mxu0 0
      %1319 = vmatpush2.bf16.msra.mxu0 0
      %1320 = vmatprep.subr.bf16.mxu0 0
      %1321 = vmatpush2.bf16.msra.mxu0 0
      %1322 = vmatprep.subr.bf16.mxu0 0
      %1323 = vmatpush2.bf16.msra.mxu0 0
      %1324 = vmatprep.subr.bf16.mxu0 0
      %1325 = vmatpush2.bf16.msra.mxu0 0
      %1326 = vmatprep.mubr.bf16.mxu0 0
      %1327 = vmatmul.mubr.bf16.gmra.mxu0 %v1210
      %v1328 = vpop.f32.mrf.mxu0
      %v1329 = vadd.f32 %v1252, %v1328
      %v1330 = vpop.f32.mrf.mxu0
      %v1331 = vadd.f32 %v1252, %v1330
      %v1332 = vpop.f32.mrf.mxu0
      %v1333 = vpop.f32.mrf.mxu0
      %1334 = vdwg.mxu0
      %v1335 = vtanh.pop %v1288
      %v1336 = vtanh.pop %v1290
      %v1337 = vtanh.pop %v1329
      %v1338 = vtanh.pop %v1331
      %v1343 = vcombine.low %v1335, %v1336
      %v1344 = vcombine.low %v1337, %v1338
      %v1346 = vunpack.c.l.s4 1966171168
      %v1347 = vunpack.c.0.s8 %v1346
      %v1348 = vlaneseq
      %v1349 = vshrl.u32 %v1348, 7
      %v1350 = vsub.s32 %v1347, %v1349
      %v1351 = vrot.slane %v1343, %v1350
      %v1353 = vunpack.c.l.s4 1966171168
      %v1354 = vunpack.c.0.s8 %v1353
      %v1355 = vlaneseq
      %v1356 = vshrl.u32 %v1355, 7
      %v1357 = vsub.s32 %v1354, %v1356
      %v1358 = vrot.slane %v1344, %v1357
      %v1359 = vcombine.low %v1351, %v1358
      %v1361 = vunpack.c.l.s4 1966171168
      %v1362 = vunpack.c.0.s8 %v1361
      %v1363 = vlaneseq
      %v1364 = vshrl.u32 %v1363, 7
      %v1365 = vsub.s32 %v1362, %v1364
      %v1366 = vrot.slane %v1359, %v1365
      %v1368 = vlaneseq
      %vm1369 = vcmp.ge.s32.totalorder %v1368, 0
      %vm1370 = vcmp.lt.s32.totalorder %v1368, 512
      %vm1371 = vmand %vm1369, %vm1370
      %1372 = vst.msk [vmem:[%s331] sm:$0xf] %vm1371, %v1366
      %s1373 = smul.u32 4, %s22
      %p1374 = scmp.lt.s32.totalorder %s1373, 7
      %s1375 = scalar_select %p1374, %s1373, 7
      %s1376 = scalar_lea.vmem %s9, %s1375
      // Predicated region
      $region57: #{net_independent_forward.1} parent=55 // pred_check
        %p1377 = pneg %p234
      $region58: #{net_independent_forward.1} parent=55 // pred_check_branch
        %1379 = sbr.rel (%p1377) target = $region60
      $region59: #{net_independent_forward.1} parent=55 // pred_region
        %s1380 = smul.u32 4, %s22
      $region60: #{net_independent_forward.1} parent=55 // pred_fallthru
        _
    $region56: #{net_independent_forward.1} parent=5 // pred_fallthru
      _
    %p1381 = scmp.le.s32.totalorder 2, %s17
    // Predicated region
    $region61: #{net_independent_forward.1} parent=5 // pred_check
      %p1382 = pneg %p1381
    $region62: #{net_independent_forward.1} parent=5 // pred_check_branch
      %1384 = sbr.rel (%p1382) target = $region64
    $region63: #{net_independent_forward.1} parent=5 // pred_region
      %s1385 = ssub.s32 %s17, 2
      // Predicated region
      $region65: #{net_independent_forward.1} parent=63 // pred_check
        %p1386 = pneg %p240
      $region66: #{net_independent_forward.1} parent=63 // pred_check_branch
        %1388 = sbr.rel (%p1386) target = $region68
      $region67: #{net_independent_forward.1} parent=63 // pred_region
        %s1389 = smul.u32 4, %s23
        %p1390 = scmp.lt.s32.totalorder %s1389, 7
        %s1391 = scalar_select %p1390, %s1389, 7
        %s1392 = scalar_lea.vmem %s9, %s1391
      $region68: #{net_independent_forward.1} parent=63 // pred_fallthru
        _
    $region64: #{net_independent_forward.1} parent=5 // pred_fallthru
      _
  $region6: #{net_independent_forward.1} parent=0 // loop_footer
    %s21 = sadd.s32 1, %s17
  $region7: #{net_independent_forward.1} parent=0 // loop_footer_branch
    %16 = sbr.rel target = $region3
  $region8: #{net_independent_forward.1} parent=0 // loop_exit
    _

</llo_original>
